<compile_context>
chip_gen: v5e
topology: v5e:2x2
jax: 0.10.0
libtpu: 0.0.40
codegen_flags: <defaults>
</compile_context>

<pallas_src>
import functools

import jax
import jax.numpy as jnp
import numpy as np
from jax.experimental import pallas as pl
from jax.experimental.pallas import tpu as pltpu


# ----------------------------------------------------------------------------
# Pallas kernel: image preprocessing  o = x * scale + bias  (per-row affine)
# ----------------------------------------------------------------------------
def _image_affine_kernel(x_ref, scale_ref, bias_ref, o_ref):
    # x_ref:     (row_tile, lane_tile)  pixel values (float32 or uint8)
    # scale_ref: (row_tile, 1)          1 / (255 * channel_std)   per row
    # bias_ref:  (row_tile, 1)          -channel_mean / channel_std per row
    x = x_ref[...].astype(jnp.float32)
    o_ref[...] = x * scale_ref[...] + bias_ref[...]


def _image_tiles(rows, hw, target_bytes=2 << 20):
    """Pick (row_tile, lane_tile) around `target_bytes` per f32 block.

    Respects the TPU (8, 128) block constraint: each tiled dim is a multiple
    of (8 | 128) unless it spans the full array dim.
    """
    elems = target_bytes // 4
    if rows * hw <= elems:
        return rows, hw                               # whole array, one block
    if hw >= elems:                                   # one row alone exceeds target
        lane_tile = max(128, (elems // 8) // 128 * 128)
        return (rows if rows < 8 else 8), lane_tile
    row_tile = max(8, (elems // hw) // 8 * 8)
    return min(row_tile, rows), hw


def image_preproc(x_nchw, channel_mean, channel_std):
    """Image preproc: scale to [0,1] then per-channel normalize.

    x_nchw: [B, C, H, W] pixel values in [0, 255] (float32; uint8 also works,
    the kernel casts internally which would cut HBM read traffic 4x).
    """
    B, C, H, W = x_nchw.shape
    rows, hw = B * C, H * W

    # Free reshape (NCHW is contiguous as [B*C, H*W]); no transpose, no extra
    # HBM traffic.
    x_flat = x_nchw.reshape(rows, hw)

    # Fold 1/255, mean, std into a per-row affine (row r -> channel r % C).
    std_f = channel_std.astype(jnp.float32)
    mean_f = channel_mean.astype(jnp.float32)
    scale = 1.0 / (255.0 * std_f)
    bias = -mean_f / std_f
    scale_col = jnp.tile(scale, B).reshape(rows, 1)
    bias_col = jnp.tile(bias, B).reshape(rows, 1)

    row_tile, lane_tile = _image_tiles(rows, hw)
    grid = (pl.cdiv(rows, row_tile), pl.cdiv(hw, lane_tile))

    out_flat = pl.pallas_call(
        _image_affine_kernel,
        out_shape=jax.ShapeDtypeStruct((rows, hw), jnp.float32),
        grid=grid,
        in_specs=[
            pl.BlockSpec((row_tile, lane_tile), lambda i, j: (i, j)),
            pl.BlockSpec((row_tile, 1), lambda i, j: (i, 0)),
            pl.BlockSpec((row_tile, 1), lambda i, j: (i, 0)),
        ],
        out_specs=pl.BlockSpec((row_tile, lane_tile), lambda i, j: (i, j)),
        compiler_params=pltpu.CompilerParams(
            dimension_semantics=("parallel", "parallel"),
        ),
    )(x_flat, scale_col, bias_col)

    return out_flat.reshape(B, C, H, W)


# ----------------------------------------------------------------------------
# Tiny features: plain jnp (a pallas_call launch is pure overhead for ~8
# elements; XLA fuses these — per performance review).
# ----------------------------------------------------------------------------
def number_preproc(x, mean, std):
    inv_std = 1.0 / float(std)               # multiply, not divide
    return (x.astype(jnp.float32) - float(mean)) * inv_std


def binary_preproc(x):
    return x.astype(jnp.float32)


# ----------------------------------------------------------------------------
# The _InferencePreprocessor equivalent: dict-in, dict-out
# ----------------------------------------------------------------------------
class InferencePreprocessorPallas:
    """Mirrors ludwig's _InferencePreprocessor: one preproc module per feature."""

    def __init__(self, config, training_set_metadata):
        self.preproc_fns = {}
        for feature_config in config["input_features"]:
            name = feature_config["name"]
            ftype = feature_config["type"]
            meta = training_set_metadata[name]
            if ftype == "number":
                self.preproc_fns[name] = functools.partial(
                    number_preproc, mean=meta["mean"], std=meta["std"]
                )
            elif ftype == "binary":
                self.preproc_fns[name] = binary_preproc
            elif ftype == "image":
                self.preproc_fns[name] = functools.partial(
                    image_preproc,
                    channel_mean=meta["channel_mean"],
                    channel_std=meta["channel_std"],
                )
            else:
                raise ValueError(f"unsupported synthetic feature type: {ftype}")

    def __call__(self, inputs):
        preproc_inputs = {}
        for name, fn in self.preproc_fns.items():
            preproc_inputs[name] = fn(inputs[name])
        return preproc_inputs


if __name__ == "__main__":
    # Deterministic synthetic config + training-set metadata (no checkpoint).
    channel_mean = jnp.array([0.40, 0.45, 0.50, 0.55], dtype=jnp.float32)
    channel_std = jnp.array([0.20, 0.25, 0.30, 0.35], dtype=jnp.float32)
    config = {
        "input_features": [
            {"name": "num_feat", "type": "number"},
            {"name": "bin_feat", "type": "binary"},
            {"name": "img_feat", "type": "image"},
        ]
    }
    training_set_metadata = {
        "num_feat": {"mean": 2.5, "std": 1.5},
        "bin_feat": {},
        "img_feat": {"channel_mean": channel_mean, "channel_std": channel_std},
    }

    preprocessor = InferencePreprocessorPallas(config, training_set_metadata)

    # Deterministic example inputs.
    key = jax.random.PRNGKey(0)
    k_img, k_num, k_bin = jax.random.split(key, 3)
    img = jax.random.uniform(
        k_img, (2, 4, 16, 16), dtype=jnp.float32, minval=0.0, maxval=255.0
    )
    num = jax.random.normal(k_num, (8,), dtype=jnp.float32) * 1.5 + 2.5
    binv = (jax.random.uniform(k_bin, (8,)) > 0.5).astype(jnp.int32)

    inputs = {"num_feat": num, "bin_feat": binv, "img_feat": img}
    outputs = preprocessor(inputs)
    jax.block_until_ready(outputs)

    # Pure-JAX reference check.
    ref_num = (num - 2.5) / 1.5
    ref_bin = binv.astype(jnp.float32)
    ref_img = (img / 255.0 - channel_mean.reshape(1, 4, 1, 1)) / channel_std.reshape(
        1, 4, 1, 1
    )
    np.testing.assert_allclose(
        np.asarray(outputs["num_feat"]), np.asarray(ref_num), rtol=1e-5, atol=1e-5
    )
    np.testing.assert_allclose(
        np.asarray(outputs["bin_feat"]), np.asarray(ref_bin), rtol=1e-6, atol=1e-6
    )
    np.testing.assert_allclose(
        np.asarray(outputs["img_feat"]), np.asarray(ref_img), rtol=1e-5, atol=1e-5
    )

    print("KERNEL_OK")
</pallas_src>

<mosaic_0001>
module attributes {stable_mosaic.version = 11 : i64} {
  func.func @_image_affine_kernel(%arg0: i32, %arg1: i32, %arg2: memref<8x256xf32, #tpu.memory_space<vmem>>, %arg3: memref<8x1xf32, #tpu.memory_space<vmem>>, %arg4: memref<8x1xf32, #tpu.memory_space<vmem>>, %arg5: memref<8x256xf32, #tpu.memory_space<vmem>>) attributes {dimension_semantics = [#tpu.dimension_semantics<parallel>, #tpu.dimension_semantics<parallel>], iteration_bounds = array<i64: 1, 1>, scalar_prefetch = 0 : i64, scratch_operands = 0 : i64, tpu.core_type = #tpu.core_type<tc>, window_params = [{transform_indices = @transform_0, window_bounds = array<i64: 8, 256>}, {transform_indices = @transform_1, window_bounds = array<i64: 8, 1>}, {transform_indices = @transform_2, window_bounds = array<i64: 8, 1>}, {transform_indices = @transform_3, window_bounds = array<i64: 8, 256>}]} {
    %c0 = arith.constant 0 : index
    %c0_0 = arith.constant 0 : index
    %0 = vector.load %arg2[%c0, %c0_0] : memref<8x256xf32, #tpu.memory_space<vmem>>, vector<8x256xf32>
    %c0_1 = arith.constant 0 : index
    %c0_2 = arith.constant 0 : index
    %1 = vector.load %arg3[%c0_1, %c0_2] : memref<8x1xf32, #tpu.memory_space<vmem>>, vector<8x1xf32>
    %2 = vector.broadcast %1 : vector<8x1xf32> to vector<8x256xf32>
    %3 = arith.mulf %0, %2 : vector<8x256xf32>
    %c0_3 = arith.constant 0 : index
    %c0_4 = arith.constant 0 : index
    %4 = vector.load %arg4[%c0_3, %c0_4] : memref<8x1xf32, #tpu.memory_space<vmem>>, vector<8x1xf32>
    %5 = vector.broadcast %4 : vector<8x1xf32> to vector<8x256xf32>
    %6 = arith.addf %3, %5 : vector<8x256xf32>
    %c0_5 = arith.constant 0 : index
    %c0_6 = arith.constant 0 : index
    %7 = vector.load %arg5[%c0_5, %c0_6] : memref<8x256xf32, #tpu.memory_space<vmem>>, vector<8x256xf32>
    tpu.vector_store %arg5[%c0_5, %c0_6], %6 {strides = array<i32>} : memref<8x256xf32, #tpu.memory_space<vmem>>, vector<8x256xf32>,
    return
  }
  func.func @transform_0(%arg0: i32, %arg1: i32) -> (i32, i32) {
    %c0_i32 = arith.constant 0 : i32
    return %arg0, %arg1 : i32, i32
  }
  func.func @transform_1(%arg0: i32, %arg1: i32) -> (i32, i32) {
    %c0_i32 = arith.constant 0 : i32
    %c0_i32_0 = arith.constant 0 : i32
    return %arg0, %c0_i32 : i32, i32
  }
  func.func @transform_2(%arg0: i32, %arg1: i32) -> (i32, i32) {
    %c0_i32 = arith.constant 0 : i32
    %c0_i32_0 = arith.constant 0 : i32
    return %arg0, %c0_i32 : i32, i32
  }
  func.func @transform_3(%arg0: i32, %arg1: i32) -> (i32, i32) {
    %c0_i32 = arith.constant 0 : i32
    return %arg0, %arg1 : i32, i32
  }
}

</mosaic_0001>

<llo_original>
// kernel: tpu_custom_call.1
$region0: #{tpu_custom_call.1}
  #allocation0 [shape = 'u32[]', space=smem, size = 0x4, offset = 0x4, fixed_abs, tag = 'smem constant byte address 0x4 - core index']
  #allocation1 [shape = 'u32[72,128]{1,0:T(1,128)}', space=vmem, size = 0x9000, scoped, tag = 'internal scratch']
  %s0 = inlined_call_operand.vmem [shape: f32[8,256], index: 0, kind: input, shape index: {}]
  %s1 = inlined_call_operand.vmem [shape: f32[8,1], index: 1, kind: input, shape index: {}]
  %s2 = inlined_call_operand.vmem [shape: f32[8,1], index: 2, kind: input, shape index: {}]
  %s3 = inlined_call_operand.hbm [shape: f32[8,256], index: 3, kind: output, shape index: {}]
  %s4 = sld [smem:[#allocation0]]
  $region22: #{tpu_custom_call.1} parent=0
    _
  %s6 = ssub.s32 1, %s4
  %s7 = scalar_select 0, %s6, %s4
  $region1: #{tpu_custom_call.1} parent=0
    #allocation2 [shape = 'u8[8192]{0}', space=vmem, size = 0x2000, scoped, tag = 'output window, operand 0, single buffered']
    #allocation3 [shape = 's32[1]{0}', space=sflag, size = 0x4, scoped, tag = 'scoped memory for tpu_custom_call.1']
    %8 = vsyncpa [#allocation3], 0
    // Predicated region
    $region2: #{tpu_custom_call.1} parent=1 // pred_check
      _
    $region3: #{tpu_custom_call.1} parent=1 // pred_check_branch
      %10 = sbr.rel (0) target = $region5
    $region4: #{tpu_custom_call.1} parent=1 // pred_region
      _
    $region5: #{tpu_custom_call.1} parent=1 // pred_fallthru
      _
    // Predicated region
    $region6: #{tpu_custom_call.1} parent=1 // pred_check
      _
    $region7: #{tpu_custom_call.1} parent=1 // pred_check_branch
      %12 = sbr.rel (0) target = $region9
    $region8: #{tpu_custom_call.1} parent=1 // pred_region
      _
    $region9: #{tpu_custom_call.1} parent=1 // pred_fallthru
      _
    // Predicated region
    $region10: #{tpu_custom_call.1} parent=1 // pred_check
      _
    $region11: #{tpu_custom_call.1} parent=1 // pred_check_branch
      %14 = sbr.rel (0) target = $region13
    $region12: #{tpu_custom_call.1} parent=1 // pred_region
      _
    $region13: #{tpu_custom_call.1} parent=1 // pred_fallthru
      _
    %v15 = vld [vmem:[%s0] sm:$0xff]
    %v16 = vld [vmem:[%s0 + $0x8] sm:$0xff]
    %v17 = vld [vmem:[%s1] sm:$0xff]
    %19 = vset.pattern.permute.xlu0 0
    %20 = vperm.xlu0 %19, %v17
    %v21 = vpop.permute.xlu0 %20
    %v23 = vmul.f32 %v15, %v21
    %v24 = vmul.f32 %v16, %v21
    %v25 = vld [vmem:[%s2] sm:$0xff]
    %27 = vset.pattern.permute.xlu0 0
    %28 = vperm.xlu0 %27, %v25
    %v29 = vpop.permute.xlu0 %28
    %v31 = vadd.f32 %v23, %v29
    %v32 = vadd.f32 %v24, %v29
    %33 = vst [vmem:[#allocation2] sm:$0xff] %v31
    %34 = vst [vmem:[#allocation2 + $0x8] sm:$0xff] %v32
    // Predicated region
    $region14: #{tpu_custom_call.1} parent=1 // pred_check
      _
    $region15: #{tpu_custom_call.1} parent=1 // pred_check_branch
      %36 = sbr.rel (0) target = $region17
    $region16: #{tpu_custom_call.1} parent=1 // pred_region
      %38 = vsyncadd [#allocation3], 0
      %s40 = sshll.u32 [#allocation2], 4
      %s41 = int_to_ptr.vmem [resolvable:$true] %s40
      %s42 = sshll.u32 %s3, 4
      %s43 = int_to_ptr.hbm [resolvable:$true] %s42
      %45 = dma.vmem_to_hbm [thread:$0]  %s41, 256, %s43, [#allocation3]
    $region17: #{tpu_custom_call.1} parent=1 // pred_fallthru
      _
    // Predicated region
    $region18: #{tpu_custom_call.1} parent=1 // pred_check
      _
    $region19: #{tpu_custom_call.1} parent=1 // pred_check_branch
      %47 = sbr.rel (0) target = $region21
    $region20: #{tpu_custom_call.1} parent=1 // pred_region
      %49 = dma.done [#allocation3], 256
    $region21: #{tpu_custom_call.1} parent=1 // pred_fallthru
      _
    %50 = vsyncpa [#allocation3], 1

</llo_original>
